<compile_context>
chip_gen: v5e
topology: v5e:2x2
jax: 0.10.0
libtpu: 0.0.40
codegen_flags: <defaults>
</compile_context>

<pallas_src>
import numpy as np

import jax
import jax.numpy as jnp
from jax.experimental import pallas as pl
from jax.experimental.pallas import tpu as pltpu

NUM_RANGE = (-10, 20)


def _numgpt_kernel(nums_ref, table_ref, repl_oh_ref, repl_out_ref,
                   bounds_ref, consts_ref, out_ref):
    # nums_ref: (T, k) packed numbers.  out_ref: (T, W) with W = k * output_dim.
    nums = nums_ref[...]                                       # (T, k)
    clamped = jnp.clip(nums, 1e-10, 1e20)
    # Bucketing value: clamped + 1e-10 for real numbers, -1 for masked (zero) numbers
    # so that no decade bucket fires and the whole row gathers zeros.
    bucket = jnp.where(nums != 0.0, clamped + 1e-10, -1.0)     # (T, k)

    # --- broadcast per-number scalars across their lane segments via the MXU ----
    c_b = jnp.dot(clamped, repl_out_ref[...],
                  preferred_element_type=jnp.float32)          # (T, W)
    v_b = jnp.dot(bucket, repl_oh_ref[...],
                  preferred_element_type=jnp.float32)          # (T, k*NE)

    # --- decade one-hot by direct comparison (no log10) -------------------------
    lo = bounds_ref[0:1, :]                                    # (1, k*NE)
    hi = bounds_ref[1:2, :]
    onehot = ((v_b >= lo) & (v_b < hi)).astype(jnp.float32)    # exact 0/1, (T, k*NE)

    # One matmul gathers BOTH the exponent embedding (exponent lanes) and the exact
    # mantissa scale 10**(-e) (mantissa lanes); all-zero rows for masked numbers.
    combined = jnp.dot(onehot, table_ref[...],
                       preferred_element_type=jnp.float32)     # (T, W)

    proto = consts_ref[0:1, :]       # mantissa prototypes, 0 on exponent lanes
    man_lane = consts_ref[1:2, :]    # 1.0 on mantissa lanes
    exp_lane = consts_ref[2:3, :]    # 1.0 on exponent lanes

    scale_m = combined * man_lane                              # scale on man lanes, else 0
    m_b = c_b * scale_m                                        # mantissa on man lanes
    diff = m_b - proto
    gauss = jnp.exp(-(diff * diff))                            # single EUP pass, 128 lanes
    man_part = jnp.where(scale_m > 0.0, gauss, 0.0)            # folds the zero-mask

    out_ref[...] = combined * exp_lane + man_part              # dense 128-lane store


def numgpt_embed(numbers, exp_table, *, frac_exp, output_dim,
                 exp_range=NUM_RANGE, tile_rows=2048):
    """numbers: [B, S] float. exp_table: [num_exponents, dim_exp] float32."""
    f32 = jnp.float32
    exp_lo = exp_range[0]
    num_exp = exp_range[1] - exp_range[0] + 1
    dim_exp = int(frac_exp * output_dim)
    dim_man = output_dim - dim_exp
    assert dim_man >= 2, "dim_man must be >= 2 (prototype spacing divides by dim_man - 1)"
    assert exp_table.shape == (num_exp, dim_exp)

    # lane-packing factor: k consecutive numbers share one lane-dense output row.
    if output_dim % 128 == 0:
        k = 1                                   # already lane-dense
    elif 128 % output_dim == 0:
        k = 128 // output_dim
    else:
        k = 1   # TODO(synk): non-divisor output_dim keeps the (<128 lane) masked-store path
    W = k * output_dim

    B, S = numbers.shape
    N = B * S
    rows = -(-N // k)                                   # packed rows needed
    T = min(int(tile_rows), ((rows + 7) // 8) * 8)
    T = max(8, (T // 8) * 8)                            # sublane-aligned block rows
    R = -(-rows // T) * T                               # padded to a whole number of blocks

    flat = jnp.zeros((R * k,), f32).at[:N].set(numbers.reshape(-1).astype(f32))
    nums2d = flat.reshape(R, k)

    # ---- host-side constant tables (numpy, f64 precision for the decade scales) ----
    NE = ((num_exp + 7) // 8) * 8
    exps = np.arange(num_exp, dtype=np.float64) + float(exp_lo)      # real exponents
    scales = (10.0 ** (-exps)).astype(np.float32)                    # exact-ish 10**-e
    lo_b = (10.0 ** exps).astype(np.float32)
    hi_b = (10.0 ** (exps + 1.0)).astype(np.float32)

    # combined gather table: [exp-embedding | decade scale] block-diagonal per segment
    exp_tab_np = np.asarray(jax.device_get(exp_table), dtype=np.float32)
    table_np = np.zeros((k * NE, W), np.float32)
    lo_np = np.full((k * NE,), np.inf, np.float32)   # padded lanes never fire
    hi_np = np.full((k * NE,), np.inf, np.float32)
    for j in range(k):
        r0, c0 = j * NE, j * output_dim
        table_np[r0:r0 + num_exp, c0:c0 + dim_exp] = exp_tab_np
        table_np[r0:r0 + num_exp, c0 + dim_exp:c0 + output_dim] = scales[:, None]
        lo_np[r0:r0 + num_exp] = lo_b
        hi_np[r0:r0 + num_exp] = hi_b
    table_big = jnp.asarray(table_np)
    bounds = jnp.asarray(np.stack([lo_np, hi_np], axis=0))           # (2, k*NE)

    jk = np.arange(k)[:, None]
    repl_oh = jnp.asarray((np.arange(k * NE)[None, :] // NE == jk).astype(np.float32))
    repl_out = jnp.asarray((np.arange(W)[None, :] // output_dim == jk).astype(np.float32))

    within = np.arange(W) % output_dim
    is_man = within >= dim_exp
    factor = 20.0 / (dim_man - 1)
    proto_big = np.where(is_man, (within - dim_exp).astype(np.float64) * factor - 10.0, 0.0)
    consts = jnp.asarray(np.stack([proto_big.astype(np.float32),
                                   is_man.astype(np.float32),
                                   (~is_man).astype(np.float32)], axis=0))   # (3, W)

    cost = pl.CostEstimate(
        flops=int(2 * R * W * (k * NE) + 2 * R * k * (W + k * NE) + 12 * R * W),
        transcendentals=int(R * W),
        bytes_accessed=int(4 * (R * k + R * W + k * NE * W + 4 * k * NE + 5 * W)),
    )

    out = pl.pallas_call(
        _numgpt_kernel,
        out_shape=jax.ShapeDtypeStruct((R, W), f32),
        grid_spec=pltpu.PrefetchScalarGridSpec(
            num_scalar_prefetch=0,
            grid=(R // T,),
            in_specs=[
                pl.BlockSpec((T, k), lambda i: (i, 0)),          # packed numbers
                pl.BlockSpec((k * NE, W), lambda i: (0, 0)),     # embed | scale gather table
                pl.BlockSpec((k, k * NE), lambda i: (0, 0)),     # one-hot segment replicator
                pl.BlockSpec((k, W), lambda i: (0, 0)),          # output segment replicator
                pl.BlockSpec((2, k * NE), lambda i: (0, 0)),     # decade lo/hi bounds
                pl.BlockSpec((3, W), lambda i: (0, 0)),          # proto | man-lane | exp-lane
            ],
            out_specs=pl.BlockSpec((T, W), lambda i: (i, 0)),
        ),
        compiler_params=pltpu.CompilerParams(
            dimension_semantics=("parallel",)),
        cost_estimate=cost,
    )(nums2d, table_big, repl_oh, repl_out, bounds, consts)

    # (R, k*output_dim) has the same contiguous layout as (R*k, output_dim) -> free reshape
    return out.reshape(R * k, output_dim)[:N].reshape(B, S, output_dim)


def numgpt_embed_ref(numbers, exp_table, *, frac_exp, output_dim,
                     exp_range=NUM_RANGE):
    """Pure-JAX reference mirroring the PyTorch forward."""
    dim_exp = int(frac_exp * output_dim)
    dim_man = output_dim - dim_exp
    mask = numbers != 0
    clamped = jnp.clip(numbers, 1e-10, 1e20)
    exponents = jnp.floor(jnp.log10(jnp.abs(clamped) + 1e-10))
    mantissas = clamped / 10.0 ** exponents
    exp_idx = exponents.astype(jnp.int32) - exp_range[0]
    exp_emb = exp_table[exp_idx]                                   # [..., dim_exp]
    factor = (10.0 - (-10.0)) / (dim_man - 1)
    proto = jnp.arange(dim_man, dtype=jnp.float32) * factor - 10.0
    diff = mantissas[..., None] - proto
    man_emb = jnp.exp(-diff ** 2)
    out = jnp.concatenate([exp_emb, man_emb], axis=-1)
    return out * mask[..., None].astype(out.dtype)


if __name__ == "__main__":
    frac_exp = 0.5
    output_dim = 32
    num_exp = NUM_RANGE[1] - NUM_RANGE[0] + 1
    dim_exp = int(frac_exp * output_dim)

    key = jax.random.PRNGKey(0)
    k_num, k_tab, k_zero, k_num2, k_zero2 = jax.random.split(key, 5)

    # deterministic nn.Embedding-style init: N(0, 1)
    exp_table = jax.random.normal(k_tab, (num_exp, dim_exp), dtype=jnp.float32)

    # --- small check: B=2, S=8 -------------------------------------------------
    B, S = 2, 8
    mag = jax.random.uniform(k_num, (B, S), minval=-8.0, maxval=12.0)
    # keep magnitudes away from decade boundaries so f32 exponent buckets agree
    mag = jnp.floor(mag) + 0.05 + 0.9 * (mag - jnp.floor(mag))
    numbers = 10.0 ** mag
    zero_mask = jax.random.bernoulli(k_zero, 0.25, (B, S))
    numbers = jnp.where(zero_mask, 0.0, numbers).astype(jnp.float32)

    out = numgpt_embed(numbers, exp_table, frac_exp=frac_exp, output_dim=output_dim)
    out = jax.block_until_ready(out)
    ref = numgpt_embed_ref(numbers, exp_table, frac_exp=frac_exp, output_dim=output_dim)
    assert out.shape == (B, S, output_dim)
    assert jnp.allclose(out, ref, atol=5e-5, rtol=5e-5)

    # --- multi-step grid + padding check: B=4, S=630, tile_rows=128 -------------
    B2, S2 = 4, 630
    mag2 = jax.random.uniform(k_num2, (B2, S2), minval=-8.0, maxval=12.0)
    mag2 = jnp.floor(mag2) + 0.05 + 0.9 * (mag2 - jnp.floor(mag2))
    numbers2 = 10.0 ** mag2
    zero_mask2 = jax.random.bernoulli(k_zero2, 0.25, (B2, S2))
    numbers2 = jnp.where(zero_mask2, 0.0, numbers2).astype(jnp.float32)

    out2 = numgpt_embed(numbers2, exp_table, frac_exp=frac_exp,
                        output_dim=output_dim, tile_rows=128)
    out2 = jax.block_until_ready(out2)
    ref2 = numgpt_embed_ref(numbers2, exp_table, frac_exp=frac_exp,
                            output_dim=output_dim)
    assert out2.shape == (B2, S2, output_dim)
    assert jnp.allclose(out2, ref2, atol=5e-5, rtol=5e-5)

    print("KERNEL_OK")
</pallas_src>

<mosaic_0001>
module attributes {stable_mosaic.version = 11 : i64} {
  func.func @_numgpt_kernel(%arg0: i32, %arg1: memref<8x4xf32, #tpu.memory_space<vmem>>, %arg2: memref<128x128xf32, #tpu.memory_space<vmem>>, %arg3: memref<4x128xf32, #tpu.memory_space<vmem>>, %arg4: memref<4x128xf32, #tpu.memory_space<vmem>>, %arg5: memref<2x128xf32, #tpu.memory_space<vmem>>, %arg6: memref<3x128xf32, #tpu.memory_space<vmem>>, %arg7: memref<8x128xf32, #tpu.memory_space<vmem>>) attributes {dimension_semantics = [#tpu.dimension_semantics<parallel>], iteration_bounds = array<i64: 1>, scalar_prefetch = 0 : i64, scratch_operands = 0 : i64, tpu.core_type = #tpu.core_type<tc>, window_params = [{transform_indices = @transform_0, window_bounds = array<i64: 8, 4>}, {pipeline_mode = #tpu.pipeline_mode<synchronous>, transform_indices = @transform_1, window_bounds = array<i64: 128, 128>}, {pipeline_mode = #tpu.pipeline_mode<synchronous>, transform_indices = @transform_2, window_bounds = array<i64: 4, 128>}, {pipeline_mode = #tpu.pipeline_mode<synchronous>, transform_indices = @transform_3, window_bounds = array<i64: 4, 128>}, {pipeline_mode = #tpu.pipeline_mode<synchronous>, transform_indices = @transform_4, window_bounds = array<i64: 2, 128>}, {pipeline_mode = #tpu.pipeline_mode<synchronous>, transform_indices = @transform_5, window_bounds = array<i64: 3, 128>}, {transform_indices = @transform_6, window_bounds = array<i64: 8, 128>}]} {
    %c0 = arith.constant 0 : index
    %c0_0 = arith.constant 0 : index
    %0 = vector.load %arg1[%c0, %c0_0] : memref<8x4xf32, #tpu.memory_space<vmem>>, vector<8x4xf32>
    %cst = arith.constant 1.000000e-10 : f32
    %cst_1 = arith.constant 1.000000e+20 : f32
    %1 = vector.broadcast %cst : f32 to vector<8x4xf32>
    %2 = arith.maximumf %1, %0 : vector<8x4xf32>
    %3 = vector.broadcast %cst_1 : f32 to vector<8x4xf32>
    %4 = arith.minimumf %3, %2 : vector<8x4xf32>
    %cst_2 = arith.constant 0.000000e+00 : f32
    %5 = vector.broadcast %cst_2 : f32 to vector<8x4xf32>
    %6 = arith.cmpf one, %0, %5 : vector<8x4xf32>
    %cst_3 = arith.constant 1.000000e-10 : f32
    %7 = vector.broadcast %cst_3 : f32 to vector<8x4xf32>
    %8 = arith.addf %4, %7 : vector<8x4xf32>
    %cst_4 = arith.constant -1.000000e+00 : f32
    %9 = vector.broadcast %cst_4 : f32 to vector<8x4xf32>
    %10 = arith.select %6, %8, %9 : vector<8x4xi1>, vector<8x4xf32>
    %c0_5 = arith.constant 0 : index
    %c0_6 = arith.constant 0 : index
    %11 = vector.load %arg4[%c0_5, %c0_6] : memref<4x128xf32, #tpu.memory_space<vmem>>, vector<4x128xf32>
    %cst_7 = arith.constant dense<0.000000e+00> : vector<8x128xf32>
    %12 = tpu.matmul %4, %11, %cst_7 {dimension_numbers = #tpu.dot_dimension_numbers<[1], [0], [0], [1], [0, 0, 1, 1], [], []>} : vector<8x4xf32>, vector<4x128xf32>, vector<8x128xf32> -> vector<8x128xf32>
    %c0_8 = arith.constant 0 : index
    %c0_9 = arith.constant 0 : index
    %13 = vector.load %arg3[%c0_8, %c0_9] : memref<4x128xf32, #tpu.memory_space<vmem>>, vector<4x128xf32>
    %cst_10 = arith.constant dense<0.000000e+00> : vector<8x128xf32>
    %14 = tpu.matmul %10, %13, %cst_10 {dimension_numbers = #tpu.dot_dimension_numbers<[1], [0], [0], [1], [0, 0, 1, 1], [], []>} : vector<8x4xf32>, vector<4x128xf32>, vector<8x128xf32> -> vector<8x128xf32>
    %c0_11 = arith.constant 0 : index
    %c0_12 = arith.constant 0 : index
    %15 = vector.load %arg5[%c0_11, %c0_12] : memref<2x128xf32, #tpu.memory_space<vmem>>, vector<1x128xf32>
    %c1 = arith.constant 1 : index
    %c0_13 = arith.constant 0 : index
    %16 = vector.load %arg5[%c1, %c0_13] : memref<2x128xf32, #tpu.memory_space<vmem>>, vector<1x128xf32>
    %17 = vector.broadcast %15 : vector<1x128xf32> to vector<8x128xf32>
    %18 = arith.cmpf oge, %14, %17 : vector<8x128xf32>
    %19 = vector.broadcast %16 : vector<1x128xf32> to vector<8x128xf32>
    %20 = arith.cmpf olt, %14, %19 : vector<8x128xf32>
    %21 = arith.andi %18, %20 : vector<8x128xi1>
    %22 = arith.extui %21 : vector<8x128xi1> to vector<8x128xi32>
    %23 = arith.sitofp %22 : vector<8x128xi32> to vector<8x128xf32>
    %c0_14 = arith.constant 0 : index
    %c0_15 = arith.constant 0 : index
    %24 = vector.load %arg2[%c0_14, %c0_15] : memref<128x128xf32, #tpu.memory_space<vmem>>, vector<128x128xf32>
    %cst_16 = arith.constant dense<0.000000e+00> : vector<8x128xf32>
    %25 = tpu.matmul %23, %24, %cst_16 {dimension_numbers = #tpu.dot_dimension_numbers<[1], [0], [0], [1], [0, 0, 1, 1], [], []>} : vector<8x128xf32>, vector<128x128xf32>, vector<8x128xf32> -> vector<8x128xf32>
    %c0_17 = arith.constant 0 : index
    %c0_18 = arith.constant 0 : index
    %26 = vector.load %arg6[%c0_17, %c0_18] : memref<3x128xf32, #tpu.memory_space<vmem>>, vector<1x128xf32>
    %c1_19 = arith.constant 1 : index
    %c0_20 = arith.constant 0 : index
    %27 = vector.load %arg6[%c1_19, %c0_20] : memref<3x128xf32, #tpu.memory_space<vmem>>, vector<1x128xf32>
    %c2 = arith.constant 2 : index
    %c0_21 = arith.constant 0 : index
    %28 = vector.load %arg6[%c2, %c0_21] : memref<3x128xf32, #tpu.memory_space<vmem>>, vector<1x128xf32>
    %29 = vector.broadcast %27 : vector<1x128xf32> to vector<8x128xf32>
    %30 = arith.mulf %25, %29 : vector<8x128xf32>
    %31 = arith.mulf %12, %30 : vector<8x128xf32>
    %32 = vector.broadcast %26 : vector<1x128xf32> to vector<8x128xf32>
    %33 = arith.subf %31, %32 : vector<8x128xf32>
    %34 = arith.mulf %33, %33 : vector<8x128xf32>
    %cst_22 = arith.constant 0.000000e+00 : f32
    %35 = vector.broadcast %cst_22 : f32 to vector<8x128xf32>
    %36 = arith.subf %35, %34 : vector<8x128xf32>
    %37 = math.exp %36 : vector<8x128xf32>
    %cst_23 = arith.constant 0.000000e+00 : f32
    %38 = vector.broadcast %cst_23 : f32 to vector<8x128xf32>
    %39 = arith.cmpf ogt, %30, %38 : vector<8x128xf32>
    %cst_24 = arith.constant 0.000000e+00 : f32
    %40 = vector.broadcast %cst_24 : f32 to vector<8x128xf32>
    %41 = arith.select %39, %37, %40 : vector<8x128xi1>, vector<8x128xf32>
    %42 = vector.broadcast %28 : vector<1x128xf32> to vector<8x128xf32>
    %43 = arith.mulf %25, %42 : vector<8x128xf32>
    %44 = arith.addf %43, %41 : vector<8x128xf32>
    %c0_25 = arith.constant 0 : index
    %c0_26 = arith.constant 0 : index
    %45 = vector.load %arg7[%c0_25, %c0_26] : memref<8x128xf32, #tpu.memory_space<vmem>>, vector<8x128xf32>
    tpu.vector_store %arg7[%c0_25, %c0_26], %44 {strides = array<i32>} : memref<8x128xf32, #tpu.memory_space<vmem>>, vector<8x128xf32>,
    return
  }
  func.func @transform_0(%arg0: i32) -> (i32, i32) {
    %c0_i32 = arith.constant 0 : i32
    %c0_i32_0 = arith.constant 0 : i32
    return %arg0, %c0_i32 : i32, i32
  }
  func.func @transform_1(%arg0: i32) -> (i32, i32) {
    %c0_i32 = arith.constant 0 : i32
    %c0_i32_0 = arith.constant 0 : i32
    %c0_i32_1 = arith.constant 0 : i32
    return %c0_i32, %c0_i32_0 : i32, i32
  }
  func.func @transform_2(%arg0: i32) -> (i32, i32) {
    %c0_i32 = arith.constant 0 : i32
    %c0_i32_0 = arith.constant 0 : i32
    %c0_i32_1 = arith.constant 0 : i32
    return %c0_i32, %c0_i32_0 : i32, i32
  }
  func.func @transform_3(%arg0: i32) -> (i32, i32) {
    %c0_i32 = arith.constant 0 : i32
    %c0_i32_0 = arith.constant 0 : i32
    %c0_i32_1 = arith.constant 0 : i32
    return %c0_i32, %c0_i32_0 : i32, i32
  }
  func.func @transform_4(%arg0: i32) -> (i32, i32) {
    %c0_i32 = arith.constant 0 : i32
    %c0_i32_0 = arith.constant 0 : i32
    %c0_i32_1 = arith.constant 0 : i32
    return %c0_i32, %c0_i32_0 : i32, i32
  }
  func.func @transform_5(%arg0: i32) -> (i32, i32) {
    %c0_i32 = arith.constant 0 : i32
    %c0_i32_0 = arith.constant 0 : i32
    %c0_i32_1 = arith.constant 0 : i32
    return %c0_i32, %c0_i32_0 : i32, i32
  }
  func.func @transform_6(%arg0: i32) -> (i32, i32) {
    %c0_i32 = arith.constant 0 : i32
    %c0_i32_0 = arith.constant 0 : i32
    return %arg0, %c0_i32 : i32, i32
  }
}

</mosaic_0001>

<llo_original>
// kernel: tpu_custom_call.1
$region0: #{tpu_custom_call.1}
  #allocation0 [shape = 'u32[]', space=smem, size = 0x4, offset = 0x4, fixed_abs, tag = 'smem constant byte address 0x4 - core index']
  #allocation1 [shape = 'u32[72,128]{1,0:T(1,128)}', space=vmem, size = 0x9000, scoped, tag = 'internal scratch']
  %s0 = inlined_call_operand.vmem [shape: f32[8,4], index: 0, kind: input, shape index: {}]
  %s1 = inlined_call_operand.hbm [shape: f32[128,128], index: 1, kind: input, shape index: {}]
  %s2 = inlined_call_operand.vmem [shape: f32[4,128], index: 2, kind: input, shape index: {}]
  %s3 = inlined_call_operand.vmem [shape: f32[4,128], index: 3, kind: input, shape index: {}]
  %s4 = inlined_call_operand.vmem [shape: f32[2,128], index: 4, kind: input, shape index: {}]
  %s5 = inlined_call_operand.vmem [shape: f32[3,128], index: 5, kind: input, shape index: {}]
  %s6 = inlined_call_operand.hbm [shape: f32[8,128], index: 6, kind: output, shape index: {}]
  %s7 = sld [smem:[#allocation0]]
  $region38: #{tpu_custom_call.1} parent=0
    _
  %s9 = ssub.s32 1, %s7
  %s10 = scalar_select 0, %s9, %s7
  $region1: #{tpu_custom_call.1} parent=0
    #allocation2 [shape = 'u8[65536]{0}', space=vmem, size = 0x10000, scoped, tag = 'input window, operand 1, single buffered']
    #allocation3 [shape = 's32[1]{0}', space=sflag, size = 0x4, scoped, tag = 'scoped memory for tpu_custom_call.1']
    #allocation4 [shape = 's32[1]{0}', space=sflag, size = 0x4, scoped, tag = 'scoped memory for tpu_custom_call.1']
    #allocation5 [shape = 'u8[4096]{0}', space=vmem, size = 0x1000, scoped, tag = 'output window, operand 0, single buffered']
    %11 = vsyncpa [#allocation3], 0
    %12 = vsyncpa [#allocation4], 0
    // Predicated region
    $region2: #{tpu_custom_call.1} parent=1 // pred_check
      _
    $region3: #{tpu_custom_call.1} parent=1 // pred_check_branch
      %14 = sbr.rel (0) target = $region5
    $region4: #{tpu_custom_call.1} parent=1 // pred_region
      _
    $region5: #{tpu_custom_call.1} parent=1 // pred_fallthru
      _
    // Predicated region
    $region6: #{tpu_custom_call.1} parent=1 // pred_check
      _
    $region7: #{tpu_custom_call.1} parent=1 // pred_check_branch
      %16 = sbr.rel (0) target = $region9
    $region8: #{tpu_custom_call.1} parent=1 // pred_region
      %18 = vsyncadd [#allocation3], 0
      %s19 = sshll.u32 %s1, 4
      %s20 = int_to_ptr.hbm [resolvable:$true] %s19
      %s21 = sshll.u32 [#allocation2], 4
      %s22 = int_to_ptr.vmem [resolvable:$true] %s21
      %27 = dma.hbm_to_vmem [thread:$0]  %s20, 2048, %s22, [#allocation3], 128, 128, 8
    $region9: #{tpu_custom_call.1} parent=1 // pred_fallthru
      _
    // Predicated region
    $region10: #{tpu_custom_call.1} parent=1 // pred_check
      _
    $region11: #{tpu_custom_call.1} parent=1 // pred_check_branch
      %29 = sbr.rel (0) target = $region13
    $region12: #{tpu_custom_call.1} parent=1 // pred_region
      _
    $region13: #{tpu_custom_call.1} parent=1 // pred_fallthru
      _
    // Predicated region
    $region14: #{tpu_custom_call.1} parent=1 // pred_check
      _
    $region15: #{tpu_custom_call.1} parent=1 // pred_check_branch
      %31 = sbr.rel (0) target = $region17
    $region16: #{tpu_custom_call.1} parent=1 // pred_region
      _
    $region17: #{tpu_custom_call.1} parent=1 // pred_fallthru
      _
    // Predicated region
    $region18: #{tpu_custom_call.1} parent=1 // pred_check
      _
    $region19: #{tpu_custom_call.1} parent=1 // pred_check_branch
      %33 = sbr.rel (0) target = $region21
    $region20: #{tpu_custom_call.1} parent=1 // pred_region
      _
    $region21: #{tpu_custom_call.1} parent=1 // pred_fallthru
      _
    // Predicated region
    $region22: #{tpu_custom_call.1} parent=1 // pred_check
      _
    $region23: #{tpu_custom_call.1} parent=1 // pred_check_branch
      %35 = sbr.rel (0) target = $region25
    $region24: #{tpu_custom_call.1} parent=1 // pred_region
      _
    $region25: #{tpu_custom_call.1} parent=1 // pred_fallthru
      _
    // Predicated region
    $region26: #{tpu_custom_call.1} parent=1 // pred_check
      _
    $region27: #{tpu_custom_call.1} parent=1 // pred_check_branch
      %37 = sbr.rel (0) target = $region29
    $region28: #{tpu_custom_call.1} parent=1 // pred_region
      %39 = dma.done [#allocation3], 2048
    $region29: #{tpu_custom_call.1} parent=1 // pred_fallthru
      _
    %v40 = vld [vmem:[%s0] sm:$0xff]
    %v41 = vmax.f32 %v40, 1e-10
    %v42 = vmin.f32 %v41, 1e+20
    %vm43 = vcmp.ne.f32.partialorder %v40, 0.0
    %v44 = vadd.f32 %v42, 1e-10
    %v45 = vsel %vm43, %v44, -1.0
    %v46 = vld [vmem:[%s3] sm:$0xf]
    %vm47 = vcmask 31744
    %v49 = vsel %vm47, %v42, 0
    %vm51 = vcmask 1043456
    %v53 = vsel %vm51, %v46, 0
    %55 = vmatpush.msra.mxu0 0.0
    %56 = vmatpush.msra.mxu0 0.0
    %57 = vmatpush.msra.mxu0 0.0
    %58 = vmatpush.msra.mxu0 0.0
    %59 = vmatpush.msra.mxu0 0.0
    %60 = vmatpush.msra.mxu0 0.0
    %61 = vmatpush.msra.mxu0 0.0
    %62 = vmatpush.msra.mxu0 0.0
    %63 = vmatpush.msra.mxu0 0.0
    %64 = vmatpush.msra.mxu0 0.0
    %65 = vmatpush.msra.mxu0 0.0
    %66 = vmatpush.msra.mxu0 0.0
    %67 = vmatpush.msra.mxu0 0.0
    %68 = vmatpush.msra.mxu0 0.0
    %69 = vmatpush.msra.mxu0 0.0
    %70 = vmatpush.msra.mxu0 %v53
    %71 = vmatmul.f32.gmra.mxu0 %v49
    %v72 = vpop.f32.mrf.mxu0
    %v73 = vadd.f32 0.0, %v72
    %74 = vdwg.mxu0
    %v75 = vld [vmem:[%s2] sm:$0xf]
    %v77 = vsel %vm47, %v45, 0
    %v80 = vsel %vm51, %v75, 0
    %82 = vmatpush.msra.mxu0 0.0
    %83 = vmatpush.msra.mxu0 0.0
    %84 = vmatpush.msra.mxu0 0.0
    %85 = vmatpush.msra.mxu0 0.0
    %86 = vmatpush.msra.mxu0 0.0
    %87 = vmatpush.msra.mxu0 0.0
    %88 = vmatpush.msra.mxu0 0.0
    %89 = vmatpush.msra.mxu0 0.0
    %90 = vmatpush.msra.mxu0 0.0
    %91 = vmatpush.msra.mxu0 0.0
    %92 = vmatpush.msra.mxu0 0.0
    %93 = vmatpush.msra.mxu0 0.0
    %94 = vmatpush.msra.mxu0 0.0
    %95 = vmatpush.msra.mxu0 0.0
    %96 = vmatpush.msra.mxu0 0.0
    %97 = vmatpush.msra.mxu0 %v80
    %98 = vmatmul.f32.gmra.mxu0 %v77
    %v99 = vpop.f32.mrf.mxu0
    %v100 = vadd.f32 0.0, %v99
    %101 = vdwg.mxu0
    %v102 = vld [vmem:[%s4] sm:$0x1]
    %v103 = vld [vmem:[%s4 + $0x1] sm:$0x1]
    %v104 = vperm.slane %v102, 0
    %vm105 = vcmp.ge.f32.partialorder %v100, %v104
    %v106 = vperm.slane %v103, 0
    %vm107 = vcmp.lt.f32.partialorder %v100, %v106
    %vm108 = vmand %vm105, %vm107
    %v109 = vsel %vm108, 1, 0
    %v110 = vcvt.s32.f32 %v109
    %v111 = vld [vmem:[#allocation2] sm:$0xff]
    %v112 = vld [vmem:[#allocation2 + $0x8] sm:$0xff]
    %v113 = vld [vmem:[#allocation2 + $0x10] sm:$0xff]
    %v114 = vld [vmem:[#allocation2 + $0x18] sm:$0xff]
    %v115 = vld [vmem:[#allocation2 + $0x20] sm:$0xff]
    %v116 = vld [vmem:[#allocation2 + $0x28] sm:$0xff]
    %v117 = vld [vmem:[#allocation2 + $0x30] sm:$0xff]
    %v118 = vld [vmem:[#allocation2 + $0x38] sm:$0xff]
    %v119 = vld [vmem:[#allocation2 + $0x40] sm:$0xff]
    %v120 = vld [vmem:[#allocation2 + $0x48] sm:$0xff]
    %v121 = vld [vmem:[#allocation2 + $0x50] sm:$0xff]
    %v122 = vld [vmem:[#allocation2 + $0x58] sm:$0xff]
    %v123 = vld [vmem:[#allocation2 + $0x60] sm:$0xff]
    %v124 = vld [vmem:[#allocation2 + $0x68] sm:$0xff]
    %v125 = vld [vmem:[#allocation2 + $0x70] sm:$0xff]
    %v126 = vld [vmem:[#allocation2 + $0x78] sm:$0xff]
    %127 = vmatpush.msra.mxu0 %v126
    %128 = vmatpush.msra.mxu0 %v125
    %129 = vmatpush.msra.mxu0 %v124
    %130 = vmatpush.msra.mxu0 %v123
    %131 = vmatpush.msra.mxu0 %v122
    %132 = vmatpush.msra.mxu0 %v121
    %133 = vmatpush.msra.mxu0 %v120
    %134 = vmatpush.msra.mxu0 %v119
    %135 = vmatpush.msra.mxu0 %v118
    %136 = vmatpush.msra.mxu0 %v117
    %137 = vmatpush.msra.mxu0 %v116
    %138 = vmatpush.msra.mxu0 %v115
    %139 = vmatpush.msra.mxu0 %v114
    %140 = vmatpush.msra.mxu0 %v113
    %141 = vmatpush.msra.mxu0 %v112
    %142 = vmatpush.msra.mxu0 %v111
    %143 = vmatmul.f32.gmra.mxu0 %v110
    %v144 = vpop.f32.mrf.mxu0
    %v145 = vadd.f32 0.0, %v144
    %146 = vdwg.mxu0
    %v147 = vld [vmem:[%s5] sm:$0x1]
    %v148 = vld [vmem:[%s5 + $0x1] sm:$0x1]
    %v149 = vld [vmem:[%s5 + $0x2] sm:$0x1]
    %v150 = vperm.slane %v148, 0
    %v151 = vmul.f32 %v145, %v150
    %v152 = vmul.f32 %v73, %v151
    %v153 = vperm.slane %v147, 0
    %v154 = vsub.f32 %v152, %v153
    %v155 = vmul.f32 %v154, %v154
    %v156 = vsub.f32 0.0, %v155
    %v157 = vmul.f32 %v156, 1.442695
    %v158 = vpow.pop %v157
    %vm159 = vcmp.gt.f32.partialorder %v151, 0.0
    %v160 = vsel %vm159, %v158, 0.0
    %v161 = vperm.slane %v149, 0
    %v162 = vmul.f32 %v145, %v161
    %v163 = vadd.f32 %v162, %v160
    %164 = vst [vmem:[#allocation5] sm:$0xff] %v163
    // Predicated region
    $region30: #{tpu_custom_call.1} parent=1 // pred_check
      _
    $region31: #{tpu_custom_call.1} parent=1 // pred_check_branch
      %166 = sbr.rel (0) target = $region33
    $region32: #{tpu_custom_call.1} parent=1 // pred_region
      %168 = vsyncadd [#allocation4], 0
      %s170 = sshll.u32 [#allocation5], 4
      %s171 = int_to_ptr.vmem [resolvable:$true] %s170
      %s172 = sshll.u32 %s6, 4
      %s173 = int_to_ptr.hbm [resolvable:$true] %s172
      %175 = dma.vmem_to_hbm [thread:$0]  %s171, 128, %s173, [#allocation4]
    $region33: #{tpu_custom_call.1} parent=1 // pred_fallthru
      _
    // Predicated region
    $region34: #{tpu_custom_call.1} parent=1 // pred_check
      _
    $region35: #{tpu_custom_call.1} parent=1 // pred_check_branch
      %177 = sbr.rel (0) target = $region37
    $region36: #{tpu_custom_call.1} parent=1 // pred_region
      %179 = dma.done [#allocation4], 128
    $region37: #{tpu_custom_call.1} parent=1 // pred_fallthru
      _
    %180 = vsyncpa [#allocation3], 1
    %181 = vsyncpa [#allocation4], 1

</llo_original>
